<compile_context>
chip_gen: v5e
topology: v5e:2x2
jax: 0.10.0
libtpu: 0.0.40
codegen_flags: <defaults>
</compile_context>

<pallas_src>
import functools

import jax
import jax.numpy as jnp
from jax.experimental import pallas as pl
from jax.experimental.pallas import tpu as pltpu


def _row_aggregation_kernel(x_ref, w1p_ref, w2_ref, out_ref, *, n_kw):
    """x_ref: (n_kw, TB, H); w1p_ref: (H, 2H) = [W1_tmb | W1_mean]; w2_ref: (1, H);
    out_ref: (TB, H).  Rows of a tile are independent problems (one per b)."""
    TB, H = out_ref.shape

    x3 = x_ref[...]                                           # (K, TB, H) f32
    # k-major flatten; layout-preserving because TB % 8 == 0 (sublane-aligned slabs).
    x = x3.reshape(n_kw * TB, H)                              # (K*TB, H)

    # One fused MXU matmul:
    #   proj[:, :H] = x @ W1_tmb    (per-row projection)
    #   proj[:, H:] = x @ W1_mean   (group-summed below -> mean projection)
    proj = jnp.dot(x, w1p_ref[...], preferred_element_type=jnp.float32)   # (K*TB, 2H)
    x_proj = proj[:, :H]                                      # (K*TB, H)
    mean_part = proj[:, H:]                                   # (K*TB, H)

    def grp(v, k):
        # Static, sublane-aligned slice of k-group k.
        return v[k * TB:(k + 1) * TB]

    # mean_b @ W1_mean recovered from the fused matmul (mean never formed explicitly).
    mean_proj = grp(mean_part, 0)
    for k in range(1, n_kw):
        mean_proj = mean_proj + grp(mean_part, k)
    mean_proj = mean_proj * (1.0 / n_kw)                      # (TB, H)

    # Per-group scores: score_k = sum_h tanh(x_proj_k + mean_proj) * w2     -> (TB, 1)
    w2 = w2_ref[...]                                          # (1, H)
    scores = [jnp.sum(jnp.tanh(grp(x_proj, k) + mean_proj) * w2,
                      axis=-1, keepdims=True)
              for k in range(n_kw)]

    # Numerically stable softmax over k, done group-wise (no tiled K*TB temporaries).
    m = scores[0]
    for k in range(1, n_kw):
        m = jnp.maximum(m, scores[k])
    exps = [jnp.exp(s - m) for s in scores]
    denom = exps[0]
    for k in range(1, n_kw):
        denom = denom + exps[k]
    inv = pl.reciprocal(denom, approx=False)                  # exact; (TB, 1), EUP slot

    # Weighted sum over k.
    acc = (exps[0] * inv) * grp(x, 0)
    for k in range(1, n_kw):
        acc = acc + (exps[k] * inv) * grp(x, k)
    out_ref[...] = acc


@functools.partial(jax.jit, static_argnames=("block_b",))
def row_aggregation(table_memory_bank, w1, w2, *, block_b=512):
    """table_memory_bank: (n_kw, n_row*bsz, H) f32.
    w1: (2H, H)  (= torch mlp_score_layer[0].weight.T; rows [:H] hit mean, rows [H:] hit tmb)
    w2: (1, H)   (= torch mlp_score_layer[2].weight)
    Returns row_rep: (n_row*bsz, H) f32."""
    n_kw, B, H = table_memory_bank.shape

    # Pre-pack the score-MLP weight so the kernel does a single MXU matmul:
    #   x @ [W1_tmb | W1_mean]  ==  exactly the lane-concat [mean; tmb] @ W1 split apart.
    w1p = jnp.concatenate([w1[H:, :], w1[:H, :]], axis=1)     # (H, 2H)

    # Tile over the independent b axis; keep tiles sublane-aligned (multiple of 8).
    tb = max(8, min(block_b, ((B + 7) // 8) * 8))
    b_pad = ((B + tb - 1) // tb) * tb
    x = table_memory_bank
    if b_pad != B:
        # Zero-padded rows give finite (uniform-softmax, zero-valued) outputs; sliced off below.
        x = jnp.pad(x, ((0, 0), (0, b_pad - B), (0, 0)))

    out = pl.pallas_call(
        functools.partial(_row_aggregation_kernel, n_kw=n_kw),
        out_shape=jax.ShapeDtypeStruct((b_pad, H), jnp.float32),
        grid=(b_pad // tb,),
        in_specs=[
            pl.BlockSpec((n_kw, tb, H), lambda i: (0, i, 0)),   # tile of b-problems
            pl.BlockSpec((H, 2 * H), lambda i: (0, 0)),         # packed W1 (resident)
            pl.BlockSpec((1, H), lambda i: (0, 0)),             # W2 (resident)
        ],
        out_specs=pl.BlockSpec((tb, H), lambda i: (i, 0)),
        compiler_params=pltpu.CompilerParams(
            dimension_semantics=("parallel",)),                 # b-tiles are independent
    )(x, w1p, w2)
    return out[:B]


def row_aggregation_ref(table_memory_bank, w1, w2):
    """Pure-JAX reference reproducing the PyTorch forward exactly."""
    n_kw = table_memory_bank.shape[0]
    mean = jnp.mean(table_memory_bank, axis=0, keepdims=True)   # (1, B, H)
    mean = jnp.transpose(mean, (1, 0, 2))                       # (B, 1, H)
    tmb = jnp.transpose(table_memory_bank, (1, 0, 2))           # (B, K, H)
    cat = jnp.concatenate([jnp.tile(mean, (1, n_kw, 1)), tmb], axis=2)   # (B, K, 2H)
    score = jnp.tanh(cat @ w1) @ w2.T                           # (B, K, 1)
    weight = jax.nn.softmax(score, axis=1)                      # softmax over n_kw
    return jnp.einsum('bk,bkh->bh', weight[..., 0], tmb)        # (B, H)


if __name__ == "__main__":
    n_kw, n_row, bsz, hsz = 8, 4, 2, 32
    B = n_row * bsz

    key = jax.random.PRNGKey(0)
    k0, k1, k2 = jax.random.split(key, 3)
    table_memory_bank = jax.random.normal(k0, (n_kw, B, hsz), jnp.float32)
    # torch Linear(2H->H, bias=False).weight is (H, 2H); stored transposed as (2H, H).
    w1 = 0.1 * jax.random.normal(k1, (2 * hsz, hsz), jnp.float32)
    # torch Linear(H->1, bias=False).weight is (1, H); stored as-is.
    w2 = 0.1 * jax.random.normal(k2, (1, hsz), jnp.float32)

    out = jax.block_until_ready(row_aggregation(table_memory_bank, w1, w2))
    ref = row_aggregation_ref(table_memory_bank, w1, w2)

    assert out.shape == (B, hsz)
    assert bool(jnp.all(jnp.isfinite(out)))
    max_err = float(jnp.max(jnp.abs(out - ref)))
    # Exact reciprocal now; residual error is only default MXU matmul-precision jitter
    # between the kernel and the XLA reference (no longer the approx-reciprocal 2e-2).
    assert max_err < 5e-3, f"max abs err {max_err}"
    print("KERNEL_OK")
</pallas_src>

<mosaic_0001>
module attributes {stable_mosaic.version = 11 : i64} {
  func.func @_row_aggregation_kernel(%arg0: i32, %arg1: memref<8x8x32xf32, #tpu.memory_space<vmem>>, %arg2: memref<32x64xf32, #tpu.memory_space<vmem>>, %arg3: memref<1x32xf32, #tpu.memory_space<vmem>>, %arg4: memref<8x32xf32, #tpu.memory_space<vmem>>) attributes {dimension_semantics = [#tpu.dimension_semantics<parallel>], iteration_bounds = array<i64: 1>, scalar_prefetch = 0 : i64, scratch_operands = 0 : i64, tpu.core_type = #tpu.core_type<tc>, window_params = [{transform_indices = @transform_0, window_bounds = array<i64: 8, 8, 32>}, {pipeline_mode = #tpu.pipeline_mode<synchronous>, transform_indices = @transform_1, window_bounds = array<i64: 32, 64>}, {pipeline_mode = #tpu.pipeline_mode<synchronous>, transform_indices = @transform_2, window_bounds = array<i64: 1, 32>}, {transform_indices = @transform_3, window_bounds = array<i64: 8, 32>}]} {
    %c0 = arith.constant 0 : index
    %c0_0 = arith.constant 0 : index
    %c0_1 = arith.constant 0 : index
    %0 = vector.load %arg1[%c0, %c0_0, %c0_1] : memref<8x8x32xf32, #tpu.memory_space<vmem>>, vector<8x8x32xf32>
    %1 = vector.shape_cast %0 : vector<8x8x32xf32> to vector<64x32xf32>
    %c0_2 = arith.constant 0 : index
    %c0_3 = arith.constant 0 : index
    %2 = vector.load %arg2[%c0_2, %c0_3] : memref<32x64xf32, #tpu.memory_space<vmem>>, vector<32x64xf32>
    %cst = arith.constant dense<0.000000e+00> : vector<64x64xf32>
    %3 = tpu.matmul %1, %2, %cst {dimension_numbers = #tpu.dot_dimension_numbers<[1], [0], [0], [1], [0, 0, 1, 1], [], []>} : vector<64x32xf32>, vector<32x64xf32>, vector<64x64xf32> -> vector<64x64xf32>
    %4 = vector.extract_strided_slice %3 {offsets = [0, 0], sizes = [64, 32], strides = [1, 1]} : vector<64x64xf32> to vector<64x32xf32>
    %5 = vector.extract_strided_slice %3 {offsets = [0, 32], sizes = [64, 32], strides = [1, 1]} : vector<64x64xf32> to vector<64x32xf32>
    %6 = vector.extract_strided_slice %5 {offsets = [0, 0], sizes = [8, 32], strides = [1, 1]} : vector<64x32xf32> to vector<8x32xf32>
    %7 = vector.extract_strided_slice %5 {offsets = [8, 0], sizes = [8, 32], strides = [1, 1]} : vector<64x32xf32> to vector<8x32xf32>
    %8 = arith.addf %6, %7 : vector<8x32xf32>
    %9 = vector.extract_strided_slice %5 {offsets = [16, 0], sizes = [8, 32], strides = [1, 1]} : vector<64x32xf32> to vector<8x32xf32>
    %10 = arith.addf %8, %9 : vector<8x32xf32>
    %11 = vector.extract_strided_slice %5 {offsets = [24, 0], sizes = [8, 32], strides = [1, 1]} : vector<64x32xf32> to vector<8x32xf32>
    %12 = arith.addf %10, %11 : vector<8x32xf32>
    %13 = vector.extract_strided_slice %5 {offsets = [32, 0], sizes = [8, 32], strides = [1, 1]} : vector<64x32xf32> to vector<8x32xf32>
    %14 = arith.addf %12, %13 : vector<8x32xf32>
    %15 = vector.extract_strided_slice %5 {offsets = [40, 0], sizes = [8, 32], strides = [1, 1]} : vector<64x32xf32> to vector<8x32xf32>
    %16 = arith.addf %14, %15 : vector<8x32xf32>
    %17 = vector.extract_strided_slice %5 {offsets = [48, 0], sizes = [8, 32], strides = [1, 1]} : vector<64x32xf32> to vector<8x32xf32>
    %18 = arith.addf %16, %17 : vector<8x32xf32>
    %19 = vector.extract_strided_slice %5 {offsets = [56, 0], sizes = [8, 32], strides = [1, 1]} : vector<64x32xf32> to vector<8x32xf32>
    %20 = arith.addf %18, %19 : vector<8x32xf32>
    %cst_4 = arith.constant 1.250000e-01 : f32
    %21 = vector.broadcast %cst_4 : f32 to vector<8x32xf32>
    %22 = arith.mulf %20, %21 : vector<8x32xf32>
    %c0_5 = arith.constant 0 : index
    %c0_6 = arith.constant 0 : index
    %23 = vector.load %arg3[%c0_5, %c0_6] : memref<1x32xf32, #tpu.memory_space<vmem>>, vector<1x32xf32>
    %24 = vector.extract_strided_slice %4 {offsets = [0, 0], sizes = [8, 32], strides = [1, 1]} : vector<64x32xf32> to vector<8x32xf32>
    %25 = arith.addf %24, %22 : vector<8x32xf32>
    %26 = math.tanh %25 : vector<8x32xf32>
    %27 = vector.broadcast %23 : vector<1x32xf32> to vector<8x32xf32>
    %28 = arith.mulf %26, %27 : vector<8x32xf32>
    %cst_7 = arith.constant dense<0.000000e+00> : vector<8xf32>
    %29 = vector.multi_reduction <add>, %28, %cst_7 [1] : vector<8x32xf32> to vector<8xf32>
    %30 = vector.shape_cast %29 : vector<8xf32> to vector<8x1xf32>
    %31 = vector.extract_strided_slice %4 {offsets = [8, 0], sizes = [8, 32], strides = [1, 1]} : vector<64x32xf32> to vector<8x32xf32>
    %32 = arith.addf %31, %22 : vector<8x32xf32>
    %33 = math.tanh %32 : vector<8x32xf32>
    %34 = vector.broadcast %23 : vector<1x32xf32> to vector<8x32xf32>
    %35 = arith.mulf %33, %34 : vector<8x32xf32>
    %cst_8 = arith.constant dense<0.000000e+00> : vector<8xf32>
    %36 = vector.multi_reduction <add>, %35, %cst_8 [1] : vector<8x32xf32> to vector<8xf32>
    %37 = vector.shape_cast %36 : vector<8xf32> to vector<8x1xf32>
    %38 = vector.extract_strided_slice %4 {offsets = [16, 0], sizes = [8, 32], strides = [1, 1]} : vector<64x32xf32> to vector<8x32xf32>
    %39 = arith.addf %38, %22 : vector<8x32xf32>
    %40 = math.tanh %39 : vector<8x32xf32>
    %41 = vector.broadcast %23 : vector<1x32xf32> to vector<8x32xf32>
    %42 = arith.mulf %40, %41 : vector<8x32xf32>
    %cst_9 = arith.constant dense<0.000000e+00> : vector<8xf32>
    %43 = vector.multi_reduction <add>, %42, %cst_9 [1] : vector<8x32xf32> to vector<8xf32>
    %44 = vector.shape_cast %43 : vector<8xf32> to vector<8x1xf32>
    %45 = vector.extract_strided_slice %4 {offsets = [24, 0], sizes = [8, 32], strides = [1, 1]} : vector<64x32xf32> to vector<8x32xf32>
    %46 = arith.addf %45, %22 : vector<8x32xf32>
    %47 = math.tanh %46 : vector<8x32xf32>
    %48 = vector.broadcast %23 : vector<1x32xf32> to vector<8x32xf32>
    %49 = arith.mulf %47, %48 : vector<8x32xf32>
    %cst_10 = arith.constant dense<0.000000e+00> : vector<8xf32>
    %50 = vector.multi_reduction <add>, %49, %cst_10 [1] : vector<8x32xf32> to vector<8xf32>
    %51 = vector.shape_cast %50 : vector<8xf32> to vector<8x1xf32>
    %52 = vector.extract_strided_slice %4 {offsets = [32, 0], sizes = [8, 32], strides = [1, 1]} : vector<64x32xf32> to vector<8x32xf32>
    %53 = arith.addf %52, %22 : vector<8x32xf32>
    %54 = math.tanh %53 : vector<8x32xf32>
    %55 = vector.broadcast %23 : vector<1x32xf32> to vector<8x32xf32>
    %56 = arith.mulf %54, %55 : vector<8x32xf32>
    %cst_11 = arith.constant dense<0.000000e+00> : vector<8xf32>
    %57 = vector.multi_reduction <add>, %56, %cst_11 [1] : vector<8x32xf32> to vector<8xf32>
    %58 = vector.shape_cast %57 : vector<8xf32> to vector<8x1xf32>
    %59 = vector.extract_strided_slice %4 {offsets = [40, 0], sizes = [8, 32], strides = [1, 1]} : vector<64x32xf32> to vector<8x32xf32>
    %60 = arith.addf %59, %22 : vector<8x32xf32>
    %61 = math.tanh %60 : vector<8x32xf32>
    %62 = vector.broadcast %23 : vector<1x32xf32> to vector<8x32xf32>
    %63 = arith.mulf %61, %62 : vector<8x32xf32>
    %cst_12 = arith.constant dense<0.000000e+00> : vector<8xf32>
    %64 = vector.multi_reduction <add>, %63, %cst_12 [1] : vector<8x32xf32> to vector<8xf32>
    %65 = vector.shape_cast %64 : vector<8xf32> to vector<8x1xf32>
    %66 = vector.extract_strided_slice %4 {offsets = [48, 0], sizes = [8, 32], strides = [1, 1]} : vector<64x32xf32> to vector<8x32xf32>
    %67 = arith.addf %66, %22 : vector<8x32xf32>
    %68 = math.tanh %67 : vector<8x32xf32>
    %69 = vector.broadcast %23 : vector<1x32xf32> to vector<8x32xf32>
    %70 = arith.mulf %68, %69 : vector<8x32xf32>
    %cst_13 = arith.constant dense<0.000000e+00> : vector<8xf32>
    %71 = vector.multi_reduction <add>, %70, %cst_13 [1] : vector<8x32xf32> to vector<8xf32>
    %72 = vector.shape_cast %71 : vector<8xf32> to vector<8x1xf32>
    %73 = vector.extract_strided_slice %4 {offsets = [56, 0], sizes = [8, 32], strides = [1, 1]} : vector<64x32xf32> to vector<8x32xf32>
    %74 = arith.addf %73, %22 : vector<8x32xf32>
    %75 = math.tanh %74 : vector<8x32xf32>
    %76 = vector.broadcast %23 : vector<1x32xf32> to vector<8x32xf32>
    %77 = arith.mulf %75, %76 : vector<8x32xf32>
    %cst_14 = arith.constant dense<0.000000e+00> : vector<8xf32>
    %78 = vector.multi_reduction <add>, %77, %cst_14 [1] : vector<8x32xf32> to vector<8xf32>
    %79 = vector.shape_cast %78 : vector<8xf32> to vector<8x1xf32>
    %80 = arith.maximumf %30, %37 : vector<8x1xf32>
    %81 = arith.maximumf %80, %44 : vector<8x1xf32>
    %82 = arith.maximumf %81, %51 : vector<8x1xf32>
    %83 = arith.maximumf %82, %58 : vector<8x1xf32>
    %84 = arith.maximumf %83, %65 : vector<8x1xf32>
    %85 = arith.maximumf %84, %72 : vector<8x1xf32>
    %86 = arith.maximumf %85, %79 : vector<8x1xf32>
    %87 = arith.subf %30, %86 : vector<8x1xf32>
    %88 = math.exp %87 : vector<8x1xf32>
    %89 = arith.subf %37, %86 : vector<8x1xf32>
    %90 = math.exp %89 : vector<8x1xf32>
    %91 = arith.subf %44, %86 : vector<8x1xf32>
    %92 = math.exp %91 : vector<8x1xf32>
    %93 = arith.subf %51, %86 : vector<8x1xf32>
    %94 = math.exp %93 : vector<8x1xf32>
    %95 = arith.subf %58, %86 : vector<8x1xf32>
    %96 = math.exp %95 : vector<8x1xf32>
    %97 = arith.subf %65, %86 : vector<8x1xf32>
    %98 = math.exp %97 : vector<8x1xf32>
    %99 = arith.subf %72, %86 : vector<8x1xf32>
    %100 = math.exp %99 : vector<8x1xf32>
    %101 = arith.subf %79, %86 : vector<8x1xf32>
    %102 = math.exp %101 : vector<8x1xf32>
    %103 = arith.addf %88, %90 : vector<8x1xf32>
    %104 = arith.addf %103, %92 : vector<8x1xf32>
    %105 = arith.addf %104, %94 : vector<8x1xf32>
    %106 = arith.addf %105, %96 : vector<8x1xf32>
    %107 = arith.addf %106, %98 : vector<8x1xf32>
    %108 = arith.addf %107, %100 : vector<8x1xf32>
    %109 = arith.addf %108, %102 : vector<8x1xf32>
    %110 = tpu.reciprocal %109 : vector<8x1xf32> -> vector<8x1xf32>
    %111 = arith.mulf %88, %110 : vector<8x1xf32>
    %112 = vector.extract_strided_slice %1 {offsets = [0, 0], sizes = [8, 32], strides = [1, 1]} : vector<64x32xf32> to vector<8x32xf32>
    %113 = vector.broadcast %111 : vector<8x1xf32> to vector<8x32xf32>
    %114 = arith.mulf %113, %112 : vector<8x32xf32>
    %115 = arith.mulf %90, %110 : vector<8x1xf32>
    %116 = vector.extract_strided_slice %1 {offsets = [8, 0], sizes = [8, 32], strides = [1, 1]} : vector<64x32xf32> to vector<8x32xf32>
    %117 = vector.broadcast %115 : vector<8x1xf32> to vector<8x32xf32>
    %118 = arith.mulf %117, %116 : vector<8x32xf32>
    %119 = arith.addf %114, %118 : vector<8x32xf32>
    %120 = arith.mulf %92, %110 : vector<8x1xf32>
    %121 = vector.extract_strided_slice %1 {offsets = [16, 0], sizes = [8, 32], strides = [1, 1]} : vector<64x32xf32> to vector<8x32xf32>
    %122 = vector.broadcast %120 : vector<8x1xf32> to vector<8x32xf32>
    %123 = arith.mulf %122, %121 : vector<8x32xf32>
    %124 = arith.addf %119, %123 : vector<8x32xf32>
    %125 = arith.mulf %94, %110 : vector<8x1xf32>
    %126 = vector.extract_strided_slice %1 {offsets = [24, 0], sizes = [8, 32], strides = [1, 1]} : vector<64x32xf32> to vector<8x32xf32>
    %127 = vector.broadcast %125 : vector<8x1xf32> to vector<8x32xf32>
    %128 = arith.mulf %127, %126 : vector<8x32xf32>
    %129 = arith.addf %124, %128 : vector<8x32xf32>
    %130 = arith.mulf %96, %110 : vector<8x1xf32>
    %131 = vector.extract_strided_slice %1 {offsets = [32, 0], sizes = [8, 32], strides = [1, 1]} : vector<64x32xf32> to vector<8x32xf32>
    %132 = vector.broadcast %130 : vector<8x1xf32> to vector<8x32xf32>
    %133 = arith.mulf %132, %131 : vector<8x32xf32>
    %134 = arith.addf %129, %133 : vector<8x32xf32>
    %135 = arith.mulf %98, %110 : vector<8x1xf32>
    %136 = vector.extract_strided_slice %1 {offsets = [40, 0], sizes = [8, 32], strides = [1, 1]} : vector<64x32xf32> to vector<8x32xf32>
    %137 = vector.broadcast %135 : vector<8x1xf32> to vector<8x32xf32>
    %138 = arith.mulf %137, %136 : vector<8x32xf32>
    %139 = arith.addf %134, %138 : vector<8x32xf32>
    %140 = arith.mulf %100, %110 : vector<8x1xf32>
    %141 = vector.extract_strided_slice %1 {offsets = [48, 0], sizes = [8, 32], strides = [1, 1]} : vector<64x32xf32> to vector<8x32xf32>
    %142 = vector.broadcast %140 : vector<8x1xf32> to vector<8x32xf32>
    %143 = arith.mulf %142, %141 : vector<8x32xf32>
    %144 = arith.addf %139, %143 : vector<8x32xf32>
    %145 = arith.mulf %102, %110 : vector<8x1xf32>
    %146 = vector.extract_strided_slice %1 {offsets = [56, 0], sizes = [8, 32], strides = [1, 1]} : vector<64x32xf32> to vector<8x32xf32>
    %147 = vector.broadcast %145 : vector<8x1xf32> to vector<8x32xf32>
    %148 = arith.mulf %147, %146 : vector<8x32xf32>
    %149 = arith.addf %144, %148 : vector<8x32xf32>
    %c0_15 = arith.constant 0 : index
    %c0_16 = arith.constant 0 : index
    %150 = vector.load %arg4[%c0_15, %c0_16] : memref<8x32xf32, #tpu.memory_space<vmem>>, vector<8x32xf32>
    tpu.vector_store %arg4[%c0_15, %c0_16], %149 {strides = array<i32>} : memref<8x32xf32, #tpu.memory_space<vmem>>, vector<8x32xf32>,
    return
  }
  func.func @transform_0(%arg0: i32) -> (i32, i32, i32) {
    %c0_i32 = arith.constant 0 : i32
    %c0_i32_0 = arith.constant 0 : i32
    %c0_i32_1 = arith.constant 0 : i32
    return %c0_i32, %arg0, %c0_i32_0 : i32, i32, i32
  }
  func.func @transform_1(%arg0: i32) -> (i32, i32) {
    %c0_i32 = arith.constant 0 : i32
    %c0_i32_0 = arith.constant 0 : i32
    %c0_i32_1 = arith.constant 0 : i32
    return %c0_i32, %c0_i32_0 : i32, i32
  }
  func.func @transform_2(%arg0: i32) -> (i32, i32) {
    %c0_i32 = arith.constant 0 : i32
    %c0_i32_0 = arith.constant 0 : i32
    %c0_i32_1 = arith.constant 0 : i32
    return %c0_i32, %c0_i32_0 : i32, i32
  }
  func.func @transform_3(%arg0: i32) -> (i32, i32) {
    %c0_i32 = arith.constant 0 : i32
    %c0_i32_0 = arith.constant 0 : i32
    return %arg0, %c0_i32 : i32, i32
  }
}

</mosaic_0001>

<llo_original>
// kernel: row_aggregation.1
$region0: #{row_aggregation.1}
  #allocation0 [shape = 'u32[]', space=smem, size = 0x4, offset = 0x4, fixed_abs, tag = 'smem constant byte address 0x4 - core index']
  #allocation1 [shape = 'u32[72,128]{1,0:T(1,128)}', space=vmem, size = 0x9000, scoped, tag = 'internal scratch']
  %s0 = inlined_call_operand.vmem [shape: f32[8,8,32], index: 0, kind: input, shape index: {}]
  %s1 = inlined_call_operand.vmem [shape: f32[32,64], index: 1, kind: input, shape index: {}]
  %s2 = inlined_call_operand.vmem [shape: f32[1,32], index: 2, kind: input, shape index: {}]
  %s3 = inlined_call_operand.hbm [shape: f32[8,32], index: 3, kind: output, shape index: {}]
  %s4 = sld [smem:[#allocation0]]
  $region22: #{row_aggregation.1} parent=0
    _
  %s6 = ssub.s32 1, %s4
  %s7 = scalar_select 0, %s6, %s4
  $region1: #{row_aggregation.1} parent=0
    #allocation2 [shape = 'u8[4096]{0}', space=vmem, size = 0x1000, scoped, tag = 'output window, operand 0, single buffered']
    #allocation3 [shape = 's32[1]{0}', space=sflag, size = 0x4, scoped, tag = 'scoped memory for row_aggregation.1']
    %8 = vsyncpa [#allocation3], 0
    // Predicated region
    $region2: #{row_aggregation.1} parent=1 // pred_check
      _
    $region3: #{row_aggregation.1} parent=1 // pred_check_branch
      %10 = sbr.rel (0) target = $region5
    $region4: #{row_aggregation.1} parent=1 // pred_region
      _
    $region5: #{row_aggregation.1} parent=1 // pred_fallthru
      _
    // Predicated region
    $region6: #{row_aggregation.1} parent=1 // pred_check
      _
    $region7: #{row_aggregation.1} parent=1 // pred_check_branch
      %12 = sbr.rel (0) target = $region9
    $region8: #{row_aggregation.1} parent=1 // pred_region
      _
    $region9: #{row_aggregation.1} parent=1 // pred_fallthru
      _
    // Predicated region
    $region10: #{row_aggregation.1} parent=1 // pred_check
      _
    $region11: #{row_aggregation.1} parent=1 // pred_check_branch
      %14 = sbr.rel (0) target = $region13
    $region12: #{row_aggregation.1} parent=1 // pred_region
      _
    $region13: #{row_aggregation.1} parent=1 // pred_fallthru
      _
    %v15 = vld [vmem:[%s0] sm:$0xff]
    %v16 = vld [vmem:[%s0 + $0x8] sm:$0xff]
    %v17 = vld [vmem:[%s0 + $0x10] sm:$0xff]
    %v18 = vld [vmem:[%s0 + $0x18] sm:$0xff]
    %v19 = vld [vmem:[%s0 + $0x20] sm:$0xff]
    %v20 = vld [vmem:[%s0 + $0x28] sm:$0xff]
    %v21 = vld [vmem:[%s0 + $0x30] sm:$0xff]
    %v22 = vld [vmem:[%s0 + $0x38] sm:$0xff]
    %v23 = vld [vmem:[%s1] sm:$0xff]
    %v24 = vld [vmem:[%s1 + $0x8] sm:$0xff]
    %v25 = vld [vmem:[%s1 + $0x10] sm:$0xff]
    %v26 = vld [vmem:[%s1 + $0x18] sm:$0xff]
    %vm27 = vcmask 261120
    %v29 = vsel %vm27, %v15, 0
    %v32 = vsel %vm27, %v16, 0
    %v35 = vsel %vm27, %v17, 0
    %v38 = vsel %vm27, %v18, 0
    %v41 = vsel %vm27, %v19, 0
    %v44 = vsel %vm27, %v20, 0
    %v47 = vsel %vm27, %v21, 0
    %v50 = vsel %vm27, %v22, 0
    %52 = vmatpush.msra.mxu0 0.0
    %53 = vmatpush.msra.mxu0 0.0
    %54 = vmatpush.msra.mxu0 0.0
    %55 = vmatpush.msra.mxu0 0.0
    %56 = vmatpush.msra.mxu0 0.0
    %57 = vmatpush.msra.mxu0 0.0
    %58 = vmatpush.msra.mxu0 0.0
    %59 = vmatpush.msra.mxu0 0.0
    %60 = vmatpush.msra.mxu0 0.0
    %61 = vmatpush.msra.mxu0 0.0
    %62 = vmatpush.msra.mxu0 0.0
    %63 = vmatpush.msra.mxu0 0.0
    %64 = vmatpush.msra.mxu0 %v26
    %65 = vmatpush.msra.mxu0 %v25
    %66 = vmatpush.msra.mxu0 %v24
    %67 = vmatpush.msra.mxu0 %v23
    %68 = vmatmul.f32.gmra.mxu0 %v29
    %v69 = vpop.f32.mrf.mxu0
    %v70 = vadd.f32 0.0, %v69
    %71 = vmatmul.f32.gmra.mxu0 %v32
    %v72 = vpop.f32.mrf.mxu0
    %v73 = vadd.f32 0.0, %v72
    %74 = vmatmul.f32.gmra.mxu0 %v35
    %v75 = vpop.f32.mrf.mxu0
    %v76 = vadd.f32 0.0, %v75
    %77 = vmatmul.f32.gmra.mxu0 %v38
    %v78 = vpop.f32.mrf.mxu0
    %v79 = vadd.f32 0.0, %v78
    %80 = vmatmul.f32.gmra.mxu0 %v41
    %v81 = vpop.f32.mrf.mxu0
    %v82 = vadd.f32 0.0, %v81
    %83 = vmatmul.f32.gmra.mxu0 %v44
    %v84 = vpop.f32.mrf.mxu0
    %v85 = vadd.f32 0.0, %v84
    %86 = vmatmul.f32.gmra.mxu0 %v47
    %v87 = vpop.f32.mrf.mxu0
    %v88 = vadd.f32 0.0, %v87
    %89 = vmatmul.f32.gmra.mxu0 %v50
    %v90 = vpop.f32.mrf.mxu0
    %v91 = vadd.f32 0.0, %v90
    %92 = vdwg.mxu0
    %v93 = vadd.f32 %v70, %v73
    %v94 = vadd.f32 %v93, %v76
    %v95 = vadd.f32 %v94, %v79
    %v96 = vadd.f32 %v95, %v82
    %v97 = vadd.f32 %v96, %v85
    %v98 = vadd.f32 %v97, %v88
    %v99 = vadd.f32 %v98, %v91
    %v100 = vmul.f32 %v99, 0.125
    %v101 = vld [vmem:[%s2] sm:$0x1]
    %103 = vrot.lane.b32.xlu0 %v100, 96
    %v104 = vpop.permute.xlu0 %103
    %v106 = vadd.f32 %v70, %v104
    %v107 = vtanh.pop %v106
    %v109 = vperm.slane %v101, 0
    %v111 = vmul.f32 %v107, %v109
    %v112 = vsel %vm27, %v111, 0.0
    %113 = vadd.xlane.f32.xlu0 %v112
    %v114 = vpop.xlane.xlu0 %113
    %v115 = vadd.f32 %v73, %v104
    %v116 = vtanh.pop %v115
    %v117 = vmul.f32 %v116, %v109
    %v118 = vsel %vm27, %v117, 0.0
    %119 = vadd.xlane.f32.xlu0 %v118
    %v120 = vpop.xlane.xlu0 %119
    %v121 = vadd.f32 %v76, %v104
    %v122 = vtanh.pop %v121
    %v123 = vmul.f32 %v122, %v109
    %v124 = vsel %vm27, %v123, 0.0
    %125 = vadd.xlane.f32.xlu0 %v124
    %v126 = vpop.xlane.xlu0 %125
    %v127 = vadd.f32 %v79, %v104
    %v128 = vtanh.pop %v127
    %v129 = vmul.f32 %v128, %v109
    %v130 = vsel %vm27, %v129, 0.0
    %131 = vadd.xlane.f32.xlu0 %v130
    %v132 = vpop.xlane.xlu0 %131
    %v133 = vadd.f32 %v82, %v104
    %v134 = vtanh.pop %v133
    %v135 = vmul.f32 %v134, %v109
    %v136 = vsel %vm27, %v135, 0.0
    %137 = vadd.xlane.f32.xlu0 %v136
    %v138 = vpop.xlane.xlu0 %137
    %v139 = vadd.f32 %v85, %v104
    %v140 = vtanh.pop %v139
    %v141 = vmul.f32 %v140, %v109
    %v142 = vsel %vm27, %v141, 0.0
    %143 = vadd.xlane.f32.xlu0 %v142
    %v144 = vpop.xlane.xlu0 %143
    %v145 = vadd.f32 %v88, %v104
    %v146 = vtanh.pop %v145
    %v147 = vmul.f32 %v146, %v109
    %v148 = vsel %vm27, %v147, 0.0
    %149 = vadd.xlane.f32.xlu0 %v148
    %v150 = vpop.xlane.xlu0 %149
    %v151 = vadd.f32 %v91, %v104
    %v152 = vtanh.pop %v151
    %v153 = vmul.f32 %v152, %v109
    %v154 = vsel %vm27, %v153, 0.0
    %155 = vadd.xlane.f32.xlu0 %v154
    %v156 = vpop.xlane.xlu0 %155
    %v157 = vmax.f32 %v114, %v120
    %v158 = vmax.f32 %v157, %v126
    %v159 = vmax.f32 %v158, %v132
    %v160 = vmax.f32 %v159, %v138
    %v161 = vmax.f32 %v160, %v144
    %v162 = vmax.f32 %v161, %v150
    %v163 = vmax.f32 %v162, %v156
    %v164 = vsub.f32 %v114, %v163
    %v165 = vmul.f32 %v164, 1.442695
    %v166 = vpow.pop %v165
    %v167 = vsub.f32 %v120, %v163
    %v168 = vmul.f32 %v167, 1.442695
    %v169 = vpow.pop %v168
    %v170 = vsub.f32 %v126, %v163
    %v171 = vmul.f32 %v170, 1.442695
    %v172 = vpow.pop %v171
    %v173 = vsub.f32 %v132, %v163
    %v174 = vmul.f32 %v173, 1.442695
    %v175 = vpow.pop %v174
    %v176 = vsub.f32 %v138, %v163
    %v177 = vmul.f32 %v176, 1.442695
    %v178 = vpow.pop %v177
    %v179 = vsub.f32 %v144, %v163
    %v180 = vmul.f32 %v179, 1.442695
    %v181 = vpow.pop %v180
    %v182 = vsub.f32 %v150, %v163
    %v183 = vmul.f32 %v182, 1.442695
    %v184 = vpow.pop %v183
    %v185 = vsub.f32 %v156, %v163
    %v186 = vmul.f32 %v185, 1.442695
    %v187 = vpow.pop %v186
    %v188 = vadd.f32 %v166, %v169
    %v189 = vadd.f32 %v188, %v172
    %v190 = vadd.f32 %v189, %v175
    %v191 = vadd.f32 %v190, %v178
    %v192 = vadd.f32 %v191, %v181
    %v193 = vadd.f32 %v192, %v184
    %v194 = vadd.f32 %v193, %v187
    %v195 = vrcp.pop %v194
    %v196 = vmul.f32 %v194, %v195
    %v197 = vsub.f32 1.0, %v196
    %v198 = vmul.f32 %v195, %v197
    %v199 = vadd.f32 %v195, %v198
    %vm200 = vweird.f32 %v194
    %vm201 = vweird.f32 %v195
    %vm202 = vmor %vm200, %vm201
    %v203 = vsel %vm202, %v195, %v199
    %v204 = vand.u32 2147483647, %v194
    %vm205 = vcmp.eq.f32.partialorder %v204, 8.507059e+37
    %v206 = vand.u32 %v194, 2147483648
    %v207 = vor.u32 1.1754944e-38, %v206
    %v208 = vsel %vm205, %v207, %v203
    %v209 = vmul.f32 %v166, %v208
    %v210 = vmul.f32 %v209, %v15
    %v211 = vmul.f32 %v169, %v208
    %v212 = vmul.f32 %v211, %v16
    %v213 = vadd.f32 %v210, %v212
    %v214 = vmul.f32 %v172, %v208
    %v215 = vmul.f32 %v214, %v17
    %v216 = vadd.f32 %v213, %v215
    %v217 = vmul.f32 %v175, %v208
    %v218 = vmul.f32 %v217, %v18
    %v219 = vadd.f32 %v216, %v218
    %v220 = vmul.f32 %v178, %v208
    %v221 = vmul.f32 %v220, %v19
    %v222 = vadd.f32 %v219, %v221
    %v223 = vmul.f32 %v181, %v208
    %v224 = vmul.f32 %v223, %v20
    %v225 = vadd.f32 %v222, %v224
    %v226 = vmul.f32 %v184, %v208
    %v227 = vmul.f32 %v226, %v21
    %v228 = vadd.f32 %v225, %v227
    %v229 = vmul.f32 %v187, %v208
    %v230 = vmul.f32 %v229, %v22
    %v231 = vadd.f32 %v228, %v230
    %232 = vst.msk [vmem:[#allocation2] sm:$0xff] %vm27, %v231
    // Predicated region
    $region14: #{row_aggregation.1} parent=1 // pred_check
      _
    $region15: #{row_aggregation.1} parent=1 // pred_check_branch
      %234 = sbr.rel (0) target = $region17
    $region16: #{row_aggregation.1} parent=1 // pred_region
      %236 = vsyncadd [#allocation3], 0
      %s238 = sshll.u32 [#allocation2], 4
      %s239 = int_to_ptr.vmem [resolvable:$true] %s238
      %s240 = sshll.u32 %s3, 4
      %s241 = int_to_ptr.hbm [resolvable:$true] %s240
      %243 = dma.vmem_to_hbm [thread:$0]  %s239, 128, %s241, [#allocation3]
    $region17: #{row_aggregation.1} parent=1 // pred_fallthru
      _
    // Predicated region
    $region18: #{row_aggregation.1} parent=1 // pred_check
      _
    $region19: #{row_aggregation.1} parent=1 // pred_check_branch
      %245 = sbr.rel (0) target = $region21
    $region20: #{row_aggregation.1} parent=1 // pred_region
      %247 = dma.done [#allocation3], 128
    $region21: #{row_aggregation.1} parent=1 // pred_fallthru
      _
    %248 = vsyncpa [#allocation3], 1

</llo_original>
